<compile_context>
chip_gen: v5e
topology: v5e:2x2
jax: 0.10.0
libtpu: 0.0.40
codegen_flags: <defaults>
</compile_context>

<pallas_src>
import jax
import jax.numpy as jnp
from jax.experimental import pallas as pl
from jax.experimental.pallas import tpu as pltpu


_TILE_BYTES = 4 * 1024 * 1024        # ~4 MiB x-tile target (near HBM roofline)
_VMEM_LIMIT_CEIL = 48 * 1024 * 1024  # headroom under v7x's 64 MiB physical VMEM/core
_LANE = 128


def _film_kernel(x_ref, g_ref, b_ref, o_ref):
    # x/o: (TR, TL). g/b: (TR, 1) column (path A) or (1, TL) row (path B), f32.
    # Single fused multiply-add; broadcast handled by shape, cast back on store.
    o_ref[...] = (x_ref[...] * g_ref[...] + b_ref[...]).astype(o_ref.dtype)


def _sublane_pack(itemsize: int) -> int:
    # f32 -> 8, bf16/f16 -> 16, int8/fp8 -> 32 (sub-32-bit dtypes pack along sublanes).
    return max(8, 32 // max(1, itemsize))


def _round_down(x: int, m: int) -> int:
    return max(m, (x // m) * m)


def _choose_tiles(R: int, L: int, itemsize: int):
    """Pick (TR, TL, grid) for a (R, L) array of the given element size."""
    sub = _sublane_pack(itemsize)
    row_bytes = L * itemsize

    if sub * row_bytes <= _TILE_BYTES:
        # Full-row contiguous slabs: one linear DMA burst per tile, 1 lane step.
        TL = L
        if R <= sub:
            TR = R  # full extent (allowed even if < 8 / unaligned)
        else:
            budget_rows = max(sub, _TILE_BYTES // max(1, row_bytes))
            TR = _round_down(min(budget_rows, R), sub)
            # Keep >=2 (ideally >=4) grid steps so both v7x TensorCores get work.
            if R >= 4 * sub:
                desired = 4
            elif R >= 2 * sub:
                desired = 2
            else:
                desired = 1
            if desired > 1:
                TR = min(TR, _round_down(pl.cdiv(R, desired), sub))
    else:
        # Row slab too big for VMEM: split the lane axis into 128-aligned tiles
        # (masked tail on the last tile costs <1% when L is large).
        TR = R if R <= sub else sub
        TL = _round_down(_TILE_BYTES // max(1, TR * itemsize), _LANE)
        if TL >= L:
            TL = L

    grid = (pl.cdiv(R, TR), pl.cdiv(L, TL))
    return TR, TL, grid


def film_forward(x_nchw: jax.Array, gamma: jax.Array, beta: jax.Array) -> jax.Array:
    """FiLM forward: gamma.view(1,C,1,1) * x + beta.view(1,C,1,1), x in NCHW."""
    N, C, H, W = x_nchw.shape
    L = H * W
    itemsize = jnp.dtype(x_nchw.dtype).itemsize

    aligned = (L % _LANE == 0)
    small_unaligned = (not aligned) and (L * itemsize <= 4096)

    gamma32 = gamma.astype(jnp.float32)
    beta32 = beta.astype(jnp.float32)

    if small_unaligned:
        # Path B: small unaligned spatial maps (7x7, 14x14, ...). Flatten to
        # (N, C*H*W) so the lane/output axis is wide; params become one
        # pre-broadcast (1, C*H*W) f32 row shared by every grid step.
        R2, L2 = N, C * L
        x2 = x_nchw.reshape(R2, L2)
        g = jnp.repeat(gamma32, L).reshape(1, L2)
        b = jnp.repeat(beta32, L).reshape(1, L2)

        def param_spec(TR, TL):
            return pl.BlockSpec((1, TL), lambda i, j: (0, j))
    else:
        # Path A: native layout flattened to (N*C, H*W); contiguous spatial
        # extent on lanes; per-row f32 parameter column (row n*C + c -> c).
        R2, L2 = N * C, L
        x2 = x_nchw.reshape(R2, L2)
        g = jnp.tile(gamma32, N).reshape(R2, 1)
        b = jnp.tile(beta32, N).reshape(R2, 1)

        def param_spec(TR, TL):
            return pl.BlockSpec((TR, 1), lambda i, j: (i, 0))

    TR, TL, grid = _choose_tiles(R2, L2, itemsize)

    # Live set ~= double-buffered x + out tiles (params negligible).
    tile_bytes = TR * TL * itemsize
    vmem_limit = int(min(_VMEM_LIMIT_CEIL, max(16 * 1024 * 1024, 5 * tile_bytes)))

    out2 = pl.pallas_call(
        _film_kernel,
        out_shape=jax.ShapeDtypeStruct((R2, L2), x2.dtype),
        grid_spec=pltpu.PrefetchScalarGridSpec(
            num_scalar_prefetch=0,
            grid=grid,  # rows outer, lanes inner: param blocks are not re-DMA'd
            in_specs=[
                pl.BlockSpec((TR, TL), lambda i, j: (i, j)),  # x tile
                param_spec(TR, TL),                           # gamma
                param_spec(TR, TL),                           # beta
            ],
            out_specs=pl.BlockSpec((TR, TL), lambda i, j: (i, j)),
        ),
        compiler_params=pltpu.CompilerParams(
            dimension_semantics=("parallel", "parallel"),
            vmem_limit_bytes=vmem_limit,
        ),
    )(x2, g, b)

    # Free reshape back to NCHW (no transpose / pad / slice anywhere).
    return out2.reshape(N, C, H, W)


def _reference(x, gamma, beta):
    C = gamma.shape[0]
    return gamma.reshape(1, C, 1, 1) * x + beta.reshape(1, C, 1, 1)


if __name__ == "__main__":
    key = jax.random.PRNGKey(0)
    k_x, k_g, k_b, k_x2 = jax.random.split(key, 4)

    # Main case: N=2, C=4, 16x16 spatial (128-aligned -> path A, full-row tiles).
    N, C, H, W = 2, 4, 16, 16
    x = jax.random.normal(k_x, (N, C, H, W), dtype=jnp.float32)
    # Module init is gamma=ones, beta=zeros; perturb slightly (deterministically)
    # so the affine is non-trivial.
    gamma = jnp.ones((C,), jnp.float32) + 0.1 * jax.random.normal(k_g, (C,), jnp.float32)
    beta = jnp.zeros((C,), jnp.float32) + 0.1 * jax.random.normal(k_b, (C,), jnp.float32)

    out = film_forward(x, gamma, beta)
    jax.block_until_ready(out)
    ref = _reference(x, gamma, beta)
    assert out.shape == x.shape
    assert jnp.allclose(out, ref, atol=1e-6, rtol=1e-6)

    # Secondary case: small non-128-aligned spatial (7x7 -> path B, lane-dense rows).
    x_small = jax.random.normal(k_x2, (N, C, 7, 7), dtype=jnp.float32)
    out_small = film_forward(x_small, gamma, beta)
    jax.block_until_ready(out_small)
    ref_small = _reference(x_small, gamma, beta)
    assert out_small.shape == x_small.shape
    assert jnp.allclose(out_small, ref_small, atol=1e-6, rtol=1e-6)

    print("KERNEL_OK")
</pallas_src>

<mosaic_0001>
module attributes {stable_mosaic.version = 11 : i64} {
  func.func @_film_kernel(%arg0: i32, %arg1: i32, %arg2: memref<8x256xf32, #tpu.memory_space<vmem>>, %arg3: memref<8x1xf32, #tpu.memory_space<vmem>>, %arg4: memref<8x1xf32, #tpu.memory_space<vmem>>, %arg5: memref<8x256xf32, #tpu.memory_space<vmem>>) attributes {dimension_semantics = [#tpu.dimension_semantics<parallel>, #tpu.dimension_semantics<parallel>], iteration_bounds = array<i64: 1, 1>, scalar_prefetch = 0 : i64, scratch_operands = 0 : i64, tpu.core_type = #tpu.core_type<tc>, window_params = [{transform_indices = @transform_0, window_bounds = array<i64: 8, 256>}, {transform_indices = @transform_1, window_bounds = array<i64: 8, 1>}, {transform_indices = @transform_2, window_bounds = array<i64: 8, 1>}, {transform_indices = @transform_3, window_bounds = array<i64: 8, 256>}]} {
    %c0 = arith.constant 0 : index
    %c0_0 = arith.constant 0 : index
    %0 = vector.load %arg2[%c0, %c0_0] : memref<8x256xf32, #tpu.memory_space<vmem>>, vector<8x256xf32>
    %c0_1 = arith.constant 0 : index
    %c0_2 = arith.constant 0 : index
    %1 = vector.load %arg3[%c0_1, %c0_2] : memref<8x1xf32, #tpu.memory_space<vmem>>, vector<8x1xf32>
    %2 = vector.broadcast %1 : vector<8x1xf32> to vector<8x256xf32>
    %3 = arith.mulf %0, %2 : vector<8x256xf32>
    %c0_3 = arith.constant 0 : index
    %c0_4 = arith.constant 0 : index
    %4 = vector.load %arg4[%c0_3, %c0_4] : memref<8x1xf32, #tpu.memory_space<vmem>>, vector<8x1xf32>
    %5 = vector.broadcast %4 : vector<8x1xf32> to vector<8x256xf32>
    %6 = arith.addf %3, %5 : vector<8x256xf32>
    %c0_5 = arith.constant 0 : index
    %c0_6 = arith.constant 0 : index
    %7 = vector.load %arg5[%c0_5, %c0_6] : memref<8x256xf32, #tpu.memory_space<vmem>>, vector<8x256xf32>
    tpu.vector_store %arg5[%c0_5, %c0_6], %6 {strides = array<i32>} : memref<8x256xf32, #tpu.memory_space<vmem>>, vector<8x256xf32>,
    return
  }
  func.func @transform_0(%arg0: i32, %arg1: i32) -> (i32, i32) {
    %c0_i32 = arith.constant 0 : i32
    return %arg0, %arg1 : i32, i32
  }
  func.func @transform_1(%arg0: i32, %arg1: i32) -> (i32, i32) {
    %c0_i32 = arith.constant 0 : i32
    %c0_i32_0 = arith.constant 0 : i32
    return %arg0, %c0_i32 : i32, i32
  }
  func.func @transform_2(%arg0: i32, %arg1: i32) -> (i32, i32) {
    %c0_i32 = arith.constant 0 : i32
    %c0_i32_0 = arith.constant 0 : i32
    return %arg0, %c0_i32 : i32, i32
  }
  func.func @transform_3(%arg0: i32, %arg1: i32) -> (i32, i32) {
    %c0_i32 = arith.constant 0 : i32
    return %arg0, %arg1 : i32, i32
  }
}

</mosaic_0001>

<llo_original>
// kernel: tpu_custom_call.1
$region0: #{tpu_custom_call.1}
  #allocation0 [shape = 'u32[]', space=smem, size = 0x4, offset = 0x4, fixed_abs, tag = 'smem constant byte address 0x4 - core index']
  #allocation1 [shape = 'u32[72,128]{1,0:T(1,128)}', space=vmem, size = 0x9000, scoped, tag = 'internal scratch']
  %s0 = inlined_call_operand.vmem [shape: f32[8,256], index: 0, kind: input, shape index: {}]
  %s1 = inlined_call_operand.vmem [shape: f32[8,1], index: 1, kind: input, shape index: {}]
  %s2 = inlined_call_operand.vmem [shape: f32[8,1], index: 2, kind: input, shape index: {}]
  %s3 = inlined_call_operand.hbm [shape: f32[8,256], index: 3, kind: output, shape index: {}]
  %s4 = sld [smem:[#allocation0]]
  $region22: #{tpu_custom_call.1} parent=0
    _
  %s6 = ssub.s32 1, %s4
  %s7 = scalar_select 0, %s6, %s4
  $region1: #{tpu_custom_call.1} parent=0
    #allocation2 [shape = 'u8[8192]{0}', space=vmem, size = 0x2000, scoped, tag = 'output window, operand 0, single buffered']
    #allocation3 [shape = 's32[1]{0}', space=sflag, size = 0x4, scoped, tag = 'scoped memory for tpu_custom_call.1']
    %8 = vsyncpa [#allocation3], 0
    // Predicated region
    $region2: #{tpu_custom_call.1} parent=1 // pred_check
      _
    $region3: #{tpu_custom_call.1} parent=1 // pred_check_branch
      %10 = sbr.rel (0) target = $region5
    $region4: #{tpu_custom_call.1} parent=1 // pred_region
      _
    $region5: #{tpu_custom_call.1} parent=1 // pred_fallthru
      _
    // Predicated region
    $region6: #{tpu_custom_call.1} parent=1 // pred_check
      _
    $region7: #{tpu_custom_call.1} parent=1 // pred_check_branch
      %12 = sbr.rel (0) target = $region9
    $region8: #{tpu_custom_call.1} parent=1 // pred_region
      _
    $region9: #{tpu_custom_call.1} parent=1 // pred_fallthru
      _
    // Predicated region
    $region10: #{tpu_custom_call.1} parent=1 // pred_check
      _
    $region11: #{tpu_custom_call.1} parent=1 // pred_check_branch
      %14 = sbr.rel (0) target = $region13
    $region12: #{tpu_custom_call.1} parent=1 // pred_region
      _
    $region13: #{tpu_custom_call.1} parent=1 // pred_fallthru
      _
    %v15 = vld [vmem:[%s0] sm:$0xff]
    %v16 = vld [vmem:[%s0 + $0x8] sm:$0xff]
    %v17 = vld [vmem:[%s1] sm:$0xff]
    %19 = vset.pattern.permute.xlu0 0
    %20 = vperm.xlu0 %19, %v17
    %v21 = vpop.permute.xlu0 %20
    %v23 = vmul.f32 %v15, %v21
    %v24 = vmul.f32 %v16, %v21
    %v25 = vld [vmem:[%s2] sm:$0xff]
    %27 = vset.pattern.permute.xlu0 0
    %28 = vperm.xlu0 %27, %v25
    %v29 = vpop.permute.xlu0 %28
    %v31 = vadd.f32 %v23, %v29
    %v32 = vadd.f32 %v24, %v29
    %33 = vst [vmem:[#allocation2] sm:$0xff] %v31
    %34 = vst [vmem:[#allocation2 + $0x8] sm:$0xff] %v32
    // Predicated region
    $region14: #{tpu_custom_call.1} parent=1 // pred_check
      _
    $region15: #{tpu_custom_call.1} parent=1 // pred_check_branch
      %36 = sbr.rel (0) target = $region17
    $region16: #{tpu_custom_call.1} parent=1 // pred_region
      %38 = vsyncadd [#allocation3], 0
      %s40 = sshll.u32 [#allocation2], 4
      %s41 = int_to_ptr.vmem [resolvable:$true] %s40
      %s42 = sshll.u32 %s3, 4
      %s43 = int_to_ptr.hbm [resolvable:$true] %s42
      %45 = dma.vmem_to_hbm [thread:$0]  %s41, 256, %s43, [#allocation3]
    $region17: #{tpu_custom_call.1} parent=1 // pred_fallthru
      _
    // Predicated region
    $region18: #{tpu_custom_call.1} parent=1 // pred_check
      _
    $region19: #{tpu_custom_call.1} parent=1 // pred_check_branch
      %47 = sbr.rel (0) target = $region21
    $region20: #{tpu_custom_call.1} parent=1 // pred_region
      %49 = dma.done [#allocation3], 256
    $region21: #{tpu_custom_call.1} parent=1 // pred_fallthru
      _
    %50 = vsyncpa [#allocation3], 1

</llo_original>
